<compile_context>
chip_gen: v7x
topology: tpu7x:2x2x1
jax: 0.10.0
libtpu: 0.0.40
codegen_flags: <defaults>
</compile_context>

<pallas_src>
import jax
import jax.numpy as jnp
from jax import lax
from jax.experimental import pallas as pl
from jax.experimental.pallas import tpu as pltpu

NUM_CLASSES = 10


def _round_up(n, m):
    return ((n + m - 1) // m) * m


def _linreg_softmax_kernel(x_ref, w_ref, b_ref, o_ref):
    # x_ref: (TB, TK)      current batch x feature tile (streamed)
    # w_ref: (NK, C, TK)   full weight in compact layout, resident in VMEM
    # b_ref: (1, C) f32    bias, fetched once
    # o_ref: (TB, C) f32   output block; doubles as the K accumulator
    k = pl.program_id(1)

    @pl.when(k == 0)
    def _init():
        o_ref[...] = jnp.zeros_like(o_ref)

    # x_tile @ w_chunk.T without materializing a transpose (MXU-native "NT"
    # contraction); accumulate in f32 directly into the resident output block.
    o_ref[...] += lax.dot_general(
        x_ref[...],
        w_ref[k],                                     # (C, TK): leading-dim index
        dimension_numbers=(((1,), (1,)), ((), ())),
        preferred_element_type=jnp.float32,
    )

    @pl.when(k == pl.num_programs(1) - 1)
    def _finalize():
        logits = o_ref[...] + b_ref[...]              # bias broadcast over batch
        m = jnp.max(logits, axis=-1, keepdims=True)   # numerically stable softmax
        e = jnp.exp(logits - m)
        # Exact divide (once per batch tile): rows sum to 1 to f32 precision.
        o_ref[...] = e / jnp.sum(e, axis=-1, keepdims=True)


def linear_regression_forward(x, weight, bias, *, tb_target=256, tk_target=4096):
    """softmax(x @ weight.T + bias): PyTorch nn.Linear(DIM, C) + nn.Softmax.

    x:      [B, DIM]  float32 or bfloat16 (used as-is -- no extra cast pass)
    weight: [C, DIM]  PyTorch nn.Linear layout
    bias:   [C]
    Returns [B, C] float32 probabilities.
    """
    B, DIM = x.shape
    C, dim_w = weight.shape
    assert dim_w == DIM and bias.shape == (C,)

    # Matmul stream dtype = caller's x dtype (bf16 halves x HBM traffic when x
    # is already stored as bf16 upstream). Never add an extra cast pass on x.
    if x.dtype not in (jnp.float32, jnp.bfloat16):
        x = x.astype(jnp.float32)
    weight = weight.astype(x.dtype)                   # W is tiny; cast negligible
    bias = bias.astype(jnp.float32).reshape(1, C)

    # K (feature) tiling: pad only to the next multiple of 128 when needed and
    # pick the largest tk <= tk_target that divides k_pad exactly.
    k_pad = _round_up(DIM, 128)
    m = k_pad // 128
    d = 1
    for cand in range(1, m + 1):
        if m % cand == 0 and cand * 128 <= max(tk_target, 128):
            d = cand
    tk = 128 * d
    nk = k_pad // tk

    # Batch tiling: never pad/copy x along the batch axis (partial edge blocks
    # are safe on the non-reduction axis). Use >=2 batch tiles when B >= 16 so
    # the "parallel" axis can be sharded across both TensorCores on v7x.
    if B < 16:
        tb = B
    else:
        tb = min(tb_target, _round_up(pl.cdiv(B, 2), 8))
    grid_b = pl.cdiv(B, tb)

    # Zero-pad the K axis only when DIM is not a multiple of 128 (zero feature
    # columns contribute nothing to the dot). The batch axis is never padded.
    if k_pad != DIM:
        x = jnp.pad(x, ((0, 0), (0, k_pad - DIM)))
        weight = jnp.pad(weight, ((0, 0), (0, k_pad - DIM)))

    # Compact W stays [C, DIM]-shaped (no 12.8x class-column padding); split it
    # into K chunks so the kernel indexes the current chunk on the leading dim.
    w_blocks = weight.reshape(C, nk, tk).transpose(1, 0, 2)      # (nk, C, tk)

    # Explicit scoped-VMEM budget (v5e default is only 16 MiB): x tile and W
    # are double-buffered; W / output pad to 16 sublanes / 128 lanes in VMEM.
    itemsize = x.dtype.itemsize
    needed = (2 * tb * tk * itemsize
              + 2 * nk * _round_up(C, 16) * tk * itemsize
              + 2 * tb * 128 * 4
              + 4 * 8 * 128 * 4)
    vmem_limit = int(min(max(2 * needed, 16 << 20), 48 << 20))

    return pl.pallas_call(
        _linreg_softmax_kernel,
        out_shape=jax.ShapeDtypeStruct((B, C), jnp.float32),
        grid=(grid_b, nk),                                       # K innermost
        in_specs=[
            pl.BlockSpec((tb, tk), lambda i, k: (i, k)),         # x tile (streamed)
            pl.BlockSpec((nk, C, tk), lambda i, k: (0, 0, 0)),   # W: fetched once
            pl.BlockSpec((1, C), lambda i, k: (0, 0)),           # bias: fetched once
        ],
        out_specs=pl.BlockSpec((tb, C), lambda i, k: (i, 0)),    # resident over k
        compiler_params=pltpu.CompilerParams(
            dimension_semantics=("parallel", "arbitrary"),
            vmem_limit_bytes=vmem_limit,
        ),
    )(x, w_blocks, bias)


def _reference(x, weight, bias):
    logits = x.astype(jnp.float32) @ weight.astype(jnp.float32).T + bias
    logits = logits - jnp.max(logits, axis=-1, keepdims=True)
    e = jnp.exp(logits)
    return e / jnp.sum(e, axis=-1, keepdims=True)


if __name__ == "__main__":
    key = jax.random.PRNGKey(0)
    kx, kw, kb, kx2, kw2, kb2 = jax.random.split(key, 6)

    # --- Case 1: small aligned shapes (DIM = bag-of-words vocab size). ---
    BATCH, DIM = 8, 512
    bag = jax.random.uniform(kx, (BATCH, DIM), dtype=jnp.float32)
    x = bag / jnp.sum(bag, axis=-1, keepdims=True)    # WikiDataset.bag_transform

    bound = 1.0 / (DIM ** 0.5)                        # PyTorch Linear init range
    weight = jax.random.uniform(kw, (NUM_CLASSES, DIM), minval=-bound,
                                maxval=bound, dtype=jnp.float32)
    bias = jax.random.uniform(kb, (NUM_CLASSES,), minval=-bound, maxval=bound,
                              dtype=jnp.float32)

    ref = _reference(x, weight, bias)
    out = jax.block_until_ready(linear_regression_forward(x, weight, bias))
    assert out.shape == (BATCH, NUM_CLASSES)
    assert jnp.allclose(out, ref, atol=2e-3, rtol=2e-3)
    assert jnp.allclose(jnp.sum(out, axis=-1), 1.0, atol=1e-3)

    # bf16 activation stream (worthwhile when x is already bf16 upstream);
    # accumulation and softmax stay in f32 so rows still sum to 1.
    out_bf16 = jax.block_until_ready(
        linear_regression_forward(x.astype(jnp.bfloat16), weight, bias))
    assert jnp.allclose(out_bf16, ref, atol=5e-3, rtol=5e-3)
    assert jnp.allclose(jnp.sum(out_bf16, axis=-1), 1.0, atol=1e-3)

    # --- Case 2: unaligned shapes -- exercises minimal K padding (300 -> 384),
    # multiple K steps (tk_target=128 -> nk=3) and a partial batch edge tile
    # (B=20, tb=16) with no batch padding. ---
    B2, D2 = 20, 300
    bag2 = jax.random.uniform(kx2, (B2, D2), dtype=jnp.float32)
    x2 = bag2 / jnp.sum(bag2, axis=-1, keepdims=True)
    bound2 = 1.0 / (D2 ** 0.5)
    w2 = jax.random.uniform(kw2, (NUM_CLASSES, D2), minval=-bound2,
                            maxval=bound2, dtype=jnp.float32)
    b2 = jax.random.uniform(kb2, (NUM_CLASSES,), minval=-bound2, maxval=bound2,
                            dtype=jnp.float32)

    ref2 = _reference(x2, w2, b2)
    out2 = jax.block_until_ready(
        linear_regression_forward(x2, w2, b2, tk_target=128))
    assert out2.shape == (B2, NUM_CLASSES)
    assert jnp.allclose(out2, ref2, atol=2e-3, rtol=2e-3)
    assert jnp.allclose(jnp.sum(out2, axis=-1), 1.0, atol=1e-3)

    print("KERNEL_OK")
</pallas_src>

<mosaic_0001>
module attributes {stable_mosaic.version = 11 : i64} {
  func.func @_linreg_softmax_kernel(%arg0: i32, %arg1: i32, %arg2: memref<8x512xf32, #tpu.memory_space<vmem>>, %arg3: memref<1x10x512xf32, #tpu.memory_space<vmem>>, %arg4: memref<1x10xf32, #tpu.memory_space<vmem>>, %arg5: memref<8x10xf32, #tpu.memory_space<vmem>>) attributes {dimension_semantics = [#tpu.dimension_semantics<parallel>, #tpu.dimension_semantics<arbitrary>], iteration_bounds = array<i64: 1, 1>, scalar_prefetch = 0 : i64, scratch_operands = 0 : i64, tpu.core_type = #tpu.core_type<tc>, window_params = [{transform_indices = @transform_0, window_bounds = array<i64: 8, 512>}, {pipeline_mode = #tpu.pipeline_mode<synchronous>, transform_indices = @transform_1, window_bounds = array<i64: 1, 10, 512>}, {pipeline_mode = #tpu.pipeline_mode<synchronous>, transform_indices = @transform_2, window_bounds = array<i64: 1, 10>}, {transform_indices = @transform_3, window_bounds = array<i64: 8, 10>}]} {
    %c0_i32 = arith.constant 0 : i32
    %0 = arith.cmpi eq, %arg1, %c0_i32 : i32
    %1 = arith.extui %0 : i1 to i32
    %c0_i32_0 = arith.constant 0 : i32
    %2 = arith.cmpi ne, %1, %c0_i32_0 : i32
    scf.if %2 {
      %cst_10 = arith.constant 0.000000e+00 : f32
      %14 = vector.broadcast %cst_10 : f32 to vector<8x10xf32>
      %c0_11 = arith.constant 0 : index
      %c0_12 = arith.constant 0 : index
      %15 = vector.load %arg5[%c0_11, %c0_12] : memref<8x10xf32, #tpu.memory_space<vmem>>, vector<8x10xf32>
      tpu.vector_store %arg5[%c0_11, %c0_12], %14 {strides = array<i32>} : memref<8x10xf32, #tpu.memory_space<vmem>>, vector<8x10xf32>,
    } else {
    }
    %c0 = arith.constant 0 : index
    %c0_1 = arith.constant 0 : index
    %3 = vector.load %arg5[%c0, %c0_1] : memref<8x10xf32, #tpu.memory_space<vmem>>, vector<8x10xf32>
    %c0_2 = arith.constant 0 : index
    %c0_3 = arith.constant 0 : index
    %4 = vector.load %arg2[%c0_2, %c0_3] : memref<8x512xf32, #tpu.memory_space<vmem>>, vector<8x512xf32>
    %5 = arith.index_cast %arg1 : i32 to index
    %c0_4 = arith.constant 0 : index
    %c0_5 = arith.constant 0 : index
    %6 = vector.load %arg3[%5, %c0_4, %c0_5] : memref<1x10x512xf32, #tpu.memory_space<vmem>>, vector<1x10x512xf32>
    %7 = vector.shape_cast %6 : vector<1x10x512xf32> to vector<10x512xf32>
    %cst = arith.constant dense<0.000000e+00> : vector<8x10xf32>
    %8 = tpu.matmul %4, %7, %cst {dimension_numbers = #tpu.dot_dimension_numbers<[1], [1], [0], [0], [0, 0, 1, 0], [], []>} : vector<8x512xf32>, vector<10x512xf32>, vector<8x10xf32> -> vector<8x10xf32>
    %9 = arith.addf %3, %8 : vector<8x10xf32>
    %c0_6 = arith.constant 0 : index
    %c0_7 = arith.constant 0 : index
    %10 = vector.load %arg5[%c0_6, %c0_7] : memref<8x10xf32, #tpu.memory_space<vmem>>, vector<8x10xf32>
    tpu.vector_store %arg5[%c0_6, %c0_7], %9 {strides = array<i32>} : memref<8x10xf32, #tpu.memory_space<vmem>>, vector<8x10xf32>,
    %c0_i32_8 = arith.constant 0 : i32
    %11 = arith.cmpi eq, %arg1, %c0_i32_8 : i32
    %12 = arith.extui %11 : i1 to i32
    %c0_i32_9 = arith.constant 0 : i32
    %13 = arith.cmpi ne, %12, %c0_i32_9 : i32
    scf.if %13 {
      %c0_10 = arith.constant 0 : index
      %c0_11 = arith.constant 0 : index
      %14 = vector.load %arg5[%c0_10, %c0_11] : memref<8x10xf32, #tpu.memory_space<vmem>>, vector<8x10xf32>
      %c0_12 = arith.constant 0 : index
      %c0_13 = arith.constant 0 : index
      %15 = vector.load %arg4[%c0_12, %c0_13] : memref<1x10xf32, #tpu.memory_space<vmem>>, vector<1x10xf32>
      %16 = vector.broadcast %15 : vector<1x10xf32> to vector<8x10xf32>
      %17 = arith.addf %14, %16 : vector<8x10xf32>
      %cst_14 = arith.constant dense<0xFF800000> : vector<8xf32>
      %18 = vector.multi_reduction <maximumf>, %17, %cst_14 [1] : vector<8x10xf32> to vector<8xf32>
      %19 = vector.shape_cast %18 : vector<8xf32> to vector<8x1xf32>
      %20 = vector.broadcast %19 : vector<8x1xf32> to vector<8x10xf32>
      %21 = arith.subf %17, %20 : vector<8x10xf32>
      %22 = math.exp %21 : vector<8x10xf32>
      %cst_15 = arith.constant dense<0.000000e+00> : vector<8xf32>
      %23 = vector.multi_reduction <add>, %22, %cst_15 [1] : vector<8x10xf32> to vector<8xf32>
      %24 = vector.shape_cast %23 : vector<8xf32> to vector<8x1xf32>
      %25 = vector.broadcast %24 : vector<8x1xf32> to vector<8x10xf32>
      %26 = arith.divf %22, %25 : vector<8x10xf32>
      %c0_16 = arith.constant 0 : index
      %c0_17 = arith.constant 0 : index
      %27 = vector.load %arg5[%c0_16, %c0_17] : memref<8x10xf32, #tpu.memory_space<vmem>>, vector<8x10xf32>
      tpu.vector_store %arg5[%c0_16, %c0_17], %26 {strides = array<i32>} : memref<8x10xf32, #tpu.memory_space<vmem>>, vector<8x10xf32>,
    } else {
    }
    return
  }
  func.func @transform_0(%arg0: i32, %arg1: i32) -> (i32, i32) {
    %c0_i32 = arith.constant 0 : i32
    return %arg0, %arg1 : i32, i32
  }
  func.func @transform_1(%arg0: i32, %arg1: i32) -> (i32, i32, i32) {
    %c0_i32 = arith.constant 0 : i32
    %c0_i32_0 = arith.constant 0 : i32
    %c0_i32_1 = arith.constant 0 : i32
    %c0_i32_2 = arith.constant 0 : i32
    return %c0_i32, %c0_i32_0, %c0_i32_1 : i32, i32, i32
  }
  func.func @transform_2(%arg0: i32, %arg1: i32) -> (i32, i32) {
    %c0_i32 = arith.constant 0 : i32
    %c0_i32_0 = arith.constant 0 : i32
    %c0_i32_1 = arith.constant 0 : i32
    return %c0_i32, %c0_i32_0 : i32, i32
  }
  func.func @transform_3(%arg0: i32, %arg1: i32) -> (i32, i32) {
    %c0_i32 = arith.constant 0 : i32
    %c0_i32_0 = arith.constant 0 : i32
    return %arg0, %c0_i32 : i32, i32
  }
}

</mosaic_0001>

<llo_original>
// kernel: tpu_custom_call.1
$region0: #{tpu_custom_call.1}
  #allocation0 [shape = 'u32[]', space=smem, size = 0x4, offset = 0x4, fixed_abs, tag = 'smem constant byte address 0x4 - core index']
  #allocation1 [shape = 'u32[144,128]{1,0:T(1,128)}', space=vmem, size = 0x12000, scoped, tag = 'internal scratch']
  %s0 = inlined_call_operand.vmem [shape: f32[8,512], index: 0, kind: input, shape index: {}]
  %s1 = inlined_call_operand.vmem [shape: f32[1,10,512], index: 1, kind: input, shape index: {}]
  %s2 = inlined_call_operand.vmem [shape: f32[1,10], index: 2, kind: input, shape index: {}]
  %s3 = inlined_call_operand.hbm [shape: f32[8,10], index: 3, kind: output, shape index: {}]
  %s4 = sld [smem:[#allocation0]]
  $region30: #{tpu_custom_call.1} parent=0
    _
  %s6 = ssub.s32 1, %s4
  %s7 = scalar_select 0, %s6, %s4
  $region1: #{tpu_custom_call.1} parent=0
    #allocation2 [shape = 'u8[4096]{0}', space=vmem, size = 0x1000, scoped, tag = 'output window, operand 0, single buffered']
    #allocation3 [shape = 's32[1]{0}', space=sflag, size = 0x4, scoped, tag = 'scoped memory for tpu_custom_call.1']
    %8 = vsyncpa [#allocation3], 0
    // Predicated region
    $region2: #{tpu_custom_call.1} parent=1 // pred_check
      _
    $region3: #{tpu_custom_call.1} parent=1 // pred_check_branch
      %10 = sbr.rel (0) target = $region5
    $region4: #{tpu_custom_call.1} parent=1 // pred_region
      _
    $region5: #{tpu_custom_call.1} parent=1 // pred_fallthru
      _
    // Predicated region
    $region6: #{tpu_custom_call.1} parent=1 // pred_check
      _
    $region7: #{tpu_custom_call.1} parent=1 // pred_check_branch
      %12 = sbr.rel (0) target = $region9
    $region8: #{tpu_custom_call.1} parent=1 // pred_region
      _
    $region9: #{tpu_custom_call.1} parent=1 // pred_fallthru
      _
    // Predicated region
    $region10: #{tpu_custom_call.1} parent=1 // pred_check
      _
    $region11: #{tpu_custom_call.1} parent=1 // pred_check_branch
      %14 = sbr.rel (0) target = $region13
    $region12: #{tpu_custom_call.1} parent=1 // pred_region
      _
    $region13: #{tpu_custom_call.1} parent=1 // pred_fallthru
      _
    %p15 = scmp.eq.s32.totalorder 0, 0
    // Predicated region
    $region14: #{tpu_custom_call.1} parent=1 // pred_check
      %p16 = pneg %p15
    $region15: #{tpu_custom_call.1} parent=1 // pred_check_branch
      %18 = sbr.rel (%p16) target = $region17
    $region16: #{tpu_custom_call.1} parent=1 // pred_region
      %vm19 = vcmask 80896
      %20 = vst.msk [vmem:[#allocation2] sm:$0xff] %vm19, 0.0
    $region17: #{tpu_custom_call.1} parent=1 // pred_fallthru
      _
    %v21 = vld [vmem:[#allocation2] sm:$0xff]
    %v22 = vld [vmem:[%s0] sm:$0xff]
    %v23 = vld [vmem:[%s0 + $0x8] sm:$0xff]
    %v24 = vld [vmem:[%s0 + $0x10] sm:$0xff]
    %v25 = vld [vmem:[%s0 + $0x18] sm:$0xff]
    %s26 = smul.u32 0, 8
    %s27 = smul.addr %s26, 8
    %s28 = scalar_lea.vmem %s1, %s27
    %v29 = vld [vmem:[%s28] sm:$0xff]
    %v30 = vld [vmem:[%s28 + $0x8] sm:$0xff]
    %v31 = vld [vmem:[%s28 + $0x10] sm:$0xff]
    %v32 = vld [vmem:[%s28 + $0x18] sm:$0xff]
    %v33 = vld [vmem:[%s28 + $0x20] sm:$0x3]
    %v34 = vld [vmem:[%s28 + $0x28] sm:$0x3]
    %v35 = vld [vmem:[%s28 + $0x30] sm:$0x3]
    %v36 = vld [vmem:[%s28 + $0x38] sm:$0x3]
    %37 = vmatprep.subr.mxu0 %v30
    %38 = vmatpush1.xpose.msra.mxu0 %v29
    %39 = vmatprep.subr.mxu0 %v34
    %40 = vmatpush1.xpose.msra.mxu0 %v33
    %41 = vmatprep.subr.mxu0 0.0
    %42 = vmatpush1.xpose.msra.mxu0 0.0
    %43 = vmatprep.subr.mxu0 0.0
    %44 = vmatpush1.xpose.msra.mxu0 0.0
    %45 = vmatprep.subr.mxu0 0.0
    %46 = vmatpush1.xpose.msra.mxu0 0.0
    %47 = vmatprep.subr.mxu0 0.0
    %48 = vmatpush1.xpose.msra.mxu0 0.0
    %49 = vmatprep.subr.mxu0 0.0
    %50 = vmatpush1.xpose.msra.mxu0 0.0
    %51 = vmatprep.subr.mxu0 0.0
    %52 = vmatpush1.xpose.msra.mxu0 0.0
    %53 = vmatprep.subr.mxu0 0.0
    %54 = vmatpush1.xpose.msra.mxu0 0.0
    %55 = vmatprep.subr.mxu0 0.0
    %56 = vmatpush1.xpose.msra.mxu0 0.0
    %57 = vmatprep.subr.mxu0 0.0
    %58 = vmatpush1.xpose.msra.mxu0 0.0
    %59 = vmatprep.subr.mxu0 0.0
    %60 = vmatpush1.xpose.msra.mxu0 0.0
    %61 = vmatprep.subr.mxu0 0.0
    %62 = vmatpush1.xpose.msra.mxu0 0.0
    %63 = vmatprep.subr.mxu0 0.0
    %64 = vmatpush1.xpose.msra.mxu0 0.0
    %65 = vmatprep.subr.mxu0 0.0
    %66 = vmatpush1.xpose.msra.mxu0 0.0
    %67 = vmatprep.subr.mxu0 0.0
    %68 = vmatpush1.xpose.msra.mxu0 0.0
    %69 = vmatprep.subr.mxu0 0.0
    %70 = vmatpush1.xpose.msra.mxu0 0.0
    %71 = vmatprep.subr.mxu0 0.0
    %72 = vmatpush1.xpose.msra.mxu0 0.0
    %73 = vmatprep.subr.mxu0 0.0
    %74 = vmatpush1.xpose.msra.mxu0 0.0
    %75 = vmatprep.subr.mxu0 0.0
    %76 = vmatpush1.xpose.msra.mxu0 0.0
    %77 = vmatprep.subr.mxu0 0.0
    %78 = vmatpush1.xpose.msra.mxu0 0.0
    %79 = vmatprep.subr.mxu0 0.0
    %80 = vmatpush1.xpose.msra.mxu0 0.0
    %81 = vmatprep.subr.mxu0 0.0
    %82 = vmatpush1.xpose.msra.mxu0 0.0
    %83 = vmatprep.subr.mxu0 0.0
    %84 = vmatpush1.xpose.msra.mxu0 0.0
    %85 = vmatprep.subr.mxu0 0.0
    %86 = vmatpush1.xpose.msra.mxu0 0.0
    %87 = vmatprep.subr.mxu0 0.0
    %88 = vmatpush1.xpose.msra.mxu0 0.0
    %89 = vmatprep.subr.mxu0 0.0
    %90 = vmatpush1.xpose.msra.mxu0 0.0
    %91 = vmatprep.subr.mxu0 0.0
    %92 = vmatpush1.xpose.msra.mxu0 0.0
    %93 = vmatprep.subr.mxu0 0.0
    %94 = vmatpush1.xpose.msra.mxu0 0.0
    %95 = vmatprep.subr.mxu0 0.0
    %96 = vmatpush1.xpose.msra.mxu0 0.0
    %97 = vmatprep.subr.mxu0 0.0
    %98 = vmatpush1.xpose.msra.mxu0 0.0
    %99 = vmatprep.subr.mxu0 0.0
    %100 = vmatpush1.xpose.msra.mxu0 0.0
    %101 = vmatprep.mubr.f32.mxu0 %v23
    %102 = vmatmul.mubr.f32.gmra.mrb[0].mxu0 %v22
    %v103 = vpop.f32.mrb[0].mxu0
    %v104 = vadd.f32 0.0, %v103
    %v105 = vpop.f32.mrb[0].mxu0
    %106 = vdwg.mxu0
    %107 = vmatprep.subr.mxu0 %v32
    %108 = vmatpush1.xpose.msra.mxu0 %v31
    %109 = vmatprep.subr.mxu0 %v36
    %110 = vmatpush1.xpose.msra.mxu0 %v35
    %111 = vmatprep.subr.mxu0 0.0
    %112 = vmatpush1.xpose.msra.mxu0 0.0
    %113 = vmatprep.subr.mxu0 0.0
    %114 = vmatpush1.xpose.msra.mxu0 0.0
    %115 = vmatprep.subr.mxu0 0.0
    %116 = vmatpush1.xpose.msra.mxu0 0.0
    %117 = vmatprep.subr.mxu0 0.0
    %118 = vmatpush1.xpose.msra.mxu0 0.0
    %119 = vmatprep.subr.mxu0 0.0
    %120 = vmatpush1.xpose.msra.mxu0 0.0
    %121 = vmatprep.subr.mxu0 0.0
    %122 = vmatpush1.xpose.msra.mxu0 0.0
    %123 = vmatprep.subr.mxu0 0.0
    %124 = vmatpush1.xpose.msra.mxu0 0.0
    %125 = vmatprep.subr.mxu0 0.0
    %126 = vmatpush1.xpose.msra.mxu0 0.0
    %127 = vmatprep.subr.mxu0 0.0
    %128 = vmatpush1.xpose.msra.mxu0 0.0
    %129 = vmatprep.subr.mxu0 0.0
    %130 = vmatpush1.xpose.msra.mxu0 0.0
    %131 = vmatprep.subr.mxu0 0.0
    %132 = vmatpush1.xpose.msra.mxu0 0.0
    %133 = vmatprep.subr.mxu0 0.0
    %134 = vmatpush1.xpose.msra.mxu0 0.0
    %135 = vmatprep.subr.mxu0 0.0
    %136 = vmatpush1.xpose.msra.mxu0 0.0
    %137 = vmatprep.subr.mxu0 0.0
    %138 = vmatpush1.xpose.msra.mxu0 0.0
    %139 = vmatprep.subr.mxu0 0.0
    %140 = vmatpush1.xpose.msra.mxu0 0.0
    %141 = vmatprep.subr.mxu0 0.0
    %142 = vmatpush1.xpose.msra.mxu0 0.0
    %143 = vmatprep.subr.mxu0 0.0
    %144 = vmatpush1.xpose.msra.mxu0 0.0
    %145 = vmatprep.subr.mxu0 0.0
    %146 = vmatpush1.xpose.msra.mxu0 0.0
    %147 = vmatprep.subr.mxu0 0.0
    %148 = vmatpush1.xpose.msra.mxu0 0.0
    %149 = vmatprep.subr.mxu0 0.0
    %150 = vmatpush1.xpose.msra.mxu0 0.0
    %151 = vmatprep.subr.mxu0 0.0
    %152 = vmatpush1.xpose.msra.mxu0 0.0
    %153 = vmatprep.subr.mxu0 0.0
    %154 = vmatpush1.xpose.msra.mxu0 0.0
    %155 = vmatprep.subr.mxu0 0.0
    %156 = vmatpush1.xpose.msra.mxu0 0.0
    %157 = vmatprep.subr.mxu0 0.0
    %158 = vmatpush1.xpose.msra.mxu0 0.0
    %159 = vmatprep.subr.mxu0 0.0
    %160 = vmatpush1.xpose.msra.mxu0 0.0
    %161 = vmatprep.subr.mxu0 0.0
    %162 = vmatpush1.xpose.msra.mxu0 0.0
    %163 = vmatprep.subr.mxu0 0.0
    %164 = vmatpush1.xpose.msra.mxu0 0.0
    %165 = vmatprep.subr.mxu0 0.0
    %166 = vmatpush1.xpose.msra.mxu0 0.0
    %167 = vmatprep.subr.mxu0 0.0
    %168 = vmatpush1.xpose.msra.mxu0 0.0
    %169 = vmatprep.subr.mxu0 0.0
    %170 = vmatpush1.xpose.msra.mxu0 0.0
    %171 = vmatprep.mubr.f32.mxu0 %v25
    %172 = vmatmul.mubr.f32.gmra.mrb[0].mxu0 %v24
    %v173 = vpop.f32.mrb[0].mxu0
    %v174 = vadd.f32 %v104, %v173
    %v175 = vpop.f32.mrb[0].mxu0
    %176 = vdwg.mxu0
    %v177 = vadd.f32 %v21, %v174
    %vm178 = vcmask 80896
    %179 = vst.msk [vmem:[#allocation2] sm:$0xff] %vm178, %v177
    // Predicated region
    $region18: #{tpu_custom_call.1} parent=1 // pred_check
      %p180 = pneg %p15
    $region19: #{tpu_custom_call.1} parent=1 // pred_check_branch
      %182 = sbr.rel (%p180) target = $region21
    $region20: #{tpu_custom_call.1} parent=1 // pred_region
      %v183 = vld [vmem:[#allocation2] sm:$0xff]
      %v184 = vld [vmem:[%s2] sm:$0x1]
      %v186 = vlaneseq
      %v187 = vshrl.u32 %v186, 7
      %v188 = vsub.s32 0, %v187
      %v189 = vrot.slane %v184, %v188
      %v191 = vadd.f32 %v183, %v189
      %v192 = vsel %vm178, %v191, -inf
      %193 = vmax.xlane.f32.xlu0 %v192
      %v194 = vpop.xlane.xlu0 %193
      %v195 = vsub.f32 %v191, %v194
      %v196 = vmul.f32 %v195, 1.442695
      %v197 = vpow.pop %v196
      %v198 = vsel %vm178, %v197, 0.0
      %199 = vadd.xlane.f32.xlu0 %v198
      %v200 = vpop.xlane.xlu0 %199
      %v201 = vrcp.pop %v200
      %v202 = vmul.f32 %v197, %v201
      %203 = vst.msk [vmem:[#allocation2] sm:$0xff] %vm178, %v202
    $region21: #{tpu_custom_call.1} parent=1 // pred_fallthru
      _
    // Predicated region
    $region22: #{tpu_custom_call.1} parent=1 // pred_check
      _
    $region23: #{tpu_custom_call.1} parent=1 // pred_check_branch
      %205 = sbr.rel (0) target = $region25
    $region24: #{tpu_custom_call.1} parent=1 // pred_region
      %s207 = ssub.s32 128, 128
      %208 = vsyncadd [#allocation3], %s207
      %s210 = sshll.u32 [#allocation2], 4
      %s211 = int_to_ptr.vmem [resolvable:$true] %s210
      %213 = dma.vmem_to_hbm [thread:$0]  %s211, 128, %s3, [#allocation3]
    $region25: #{tpu_custom_call.1} parent=1 // pred_fallthru
      _
    // Predicated region
    $region26: #{tpu_custom_call.1} parent=1 // pred_check
      _
    $region27: #{tpu_custom_call.1} parent=1 // pred_check_branch
      %215 = sbr.rel (0) target = $region29
    $region28: #{tpu_custom_call.1} parent=1 // pred_region
      %216 = dma.done [#allocation3], 128
    $region29: #{tpu_custom_call.1} parent=1 // pred_fallthru
      _
    %217 = vsyncpa [#allocation3], 1

</llo_original>
